<compile_context>
chip_gen: v5e
topology: v5e:2x2
jax: 0.10.0
libtpu: 0.0.40
codegen_flags: <defaults>
</compile_context>

<pallas_src>
import functools
import math

import jax
import jax.numpy as jnp
from jax.experimental import pallas as pl
from jax.experimental.pallas import tpu as pltpu


def graph_conv_kernel(x_ref, a_ref, w_ref, b_ref, o_ref):
    # x_ref : (nb*C_in, TVp)   bf16  (VMEM)
    # a_ref : (TVp, TVp)       bf16  (VMEM)  block-diagonal kron(eye(T), A)
    # w_ref : (C_out, C_in)    f32   (SMEM if C_in <= 8, else VMEM)
    # b_ref : (C_out, TVp)     f32   (VMEM)  pre-broadcast bias
    # o_ref : (nb, C_out, TVp)       (VMEM)
    nb, c_out, tvp = o_ref.shape
    c_in = w_ref.shape[1]

    # Stage 1: graph mixing over joints.  Full-width MXU matmul (K = TVp),
    # bf16 operands, f32 accumulation.  No relayout needed afterwards.
    xa = jnp.dot(x_ref[...], a_ref[...],
                 preferred_element_type=jnp.float32)        # (nb*C_in, TVp) f32

    bias = b_ref[...]                                       # (C_out, TVp) f32

    if c_in <= 8:
        # Stage 2: 1x1 conv as scalar*vector MACs on the VPU (K = C_in is too
        # small for the MXU).  Weights are SMEM scalars (free splats), two
        # accumulator chains break the serial dependency, bias is folded into
        # the c = 0 term.
        for n in range(nb):
            xn = xa[n * c_in:(n + 1) * c_in, :]              # (C_in, TVp) f32
            for o in range(c_out):
                acc0 = xn[0:1, :] * w_ref[o, 0] + bias[o:o + 1, :]
                acc1 = xn[1:2, :] * w_ref[o, 1] if c_in > 1 else None
                for c in range(2, c_in, 2):
                    acc0 = acc0 + xn[c:c + 1, :] * w_ref[o, c]
                for c in range(3, c_in, 2):
                    acc1 = acc1 + xn[c:c + 1, :] * w_ref[o, c]
                y = acc0 if acc1 is None else acc0 + acc1    # (1, TVp) f32
                o_ref[n, o:o + 1, :] = y.astype(o_ref.dtype)
    else:
        # Stage 2 (large C_in): per-batch MXU matmul with bf16 operands,
        # f32 accumulation, lane-dense (C_out, TVp) stores.
        w_bf = w_ref[...].astype(jnp.bfloat16)
        xa_bf = xa.astype(jnp.bfloat16)
        for n in range(nb):
            y = jnp.dot(w_bf, xa_bf[n * c_in:(n + 1) * c_in, :],
                        preferred_element_type=jnp.float32) + bias
            o_ref[n] = y.astype(o_ref.dtype)


def _round_up(x, m):
    return ((x + m - 1) // m) * m


def _tpu_info():
    """Returns (vmem_capacity_bytes, assume_multi_tensorcore)."""
    try:
        cap = int(pltpu.get_tpu_info().vmem_capacity_bytes)
    except Exception:
        return 64 << 20, False        # conservative fallback
    # v7x has 64 MiB VMEM per TensorCore and 2 TensorCores per chip.
    return cap, cap <= (64 << 20)


def _choose_tiling(N, C_in, C_out, TVp, in_bytes, out_bytes):
    """Pick the per-grid-step batch tile nb and the padded batch size."""
    vmem_cap, multi_core = _tpu_info()
    # Per-generation double-buffered tile budget (v5e/v6e: 128 MiB physical
    # VMEM -> 12 MiB of tiles; v7x: 64 MiB/TC -> 8 MiB).
    budget = (12 << 20) if vmem_cap >= (100 << 20) else (8 << 20)

    # nb granule so the x block's sublane dim (nb*C_in) stays a multiple of 8.
    step = 8 // math.gcd(C_in, 8)

    # Per-batch-element VMEM cost per grid step, INCLUDING f32 intermediates.
    per_elem = (2 * C_in * TVp * in_bytes        # x tile (double-buffered)
                + 2 * C_out * TVp * out_bytes    # out tile (double-buffered)
                + C_in * TVp * 4                 # xa (f32 stage-1 result)
                + C_out * TVp * 4)               # stage-2 f32 accumulators
    fixed = 2 * TVp * TVp * in_bytes + 2 * C_out * TVp * 4   # A_blk + bias
    avail = max(budget - fixed, per_elem * step)
    nb_max = max(step, (avail // per_elem) // step * step)
    nb_max = min(nb_max, _round_up(32, step))    # bound stage-2 unrolling

    min_steps = 2 if (multi_core and N > 1) else 1
    nb = min(nb_max, _round_up(pl.cdiv(N, min_steps), step))
    n_pad = _round_up(N, nb)                     # nb need not divide N
    if multi_core and N > 1 and n_pad // nb < 2:
        n_pad = 2 * nb                           # keep >=2 steps for the 2 TCs
    return nb, n_pad, vmem_cap


@functools.partial(jax.jit, static_argnames=("compute_dtype",))
def graph_conv(x, A, w, b, *, compute_dtype=jnp.bfloat16):
    """x: (N, C_in, T, V); A: (V, V); w: (C_out, C_in); b: (C_out,)."""
    N, C_in, T, V = x.shape
    C_out = w.shape[0]
    TV = T * V
    TVp = _round_up(TV, 128)          # lane axis stays a multiple of 128

    in_bytes = jnp.dtype(compute_dtype).itemsize
    out_bytes = jnp.dtype(x.dtype).itemsize
    nb, n_pad, vmem_cap = _choose_tiling(N, C_in, C_out, TVp, in_bytes, out_bytes)
    grid = (n_pad // nb,)

    # ---- wrapper-side layout plumbing (metadata reshapes / tiny constants) ----
    xc = x.astype(compute_dtype)
    if n_pad != N:
        xc = jnp.pad(xc, ((0, n_pad - N), (0, 0), (0, 0), (0, 0)))
    x_flat = xc.reshape(n_pad * C_in, TV)
    if TVp != TV:
        x_flat = jnp.pad(x_flat, ((0, 0), (0, TVp - TV)))

    # Block-diagonal adjacency kron(eye(T), A): stage 1 becomes a full-width
    # (K = N = TVp) MXU matmul and the in-kernel relayout disappears.
    a_blk = jnp.kron(jnp.eye(T, dtype=jnp.float32), A.astype(jnp.float32))
    if TVp != TV:
        a_blk = jnp.pad(a_blk, ((0, TVp - TV), (0, TVp - TV)))
    a_blk = a_blk.astype(compute_dtype)

    w_f = w.astype(jnp.float32)
    b_bcast = jnp.broadcast_to(b.astype(jnp.float32)[:, None], (C_out, TVp))

    # Small C_in: weights as SMEM scalars (scalar*vector MACs in the kernel).
    w_spec = (pl.BlockSpec(memory_space=pltpu.MemorySpace.SMEM) if C_in <= 8
              else pl.BlockSpec((C_out, C_in), lambda i: (0, 0)))

    rows = nb * C_in
    out = pl.pallas_call(
        graph_conv_kernel,
        out_shape=jax.ShapeDtypeStruct((n_pad, C_out, TVp), x.dtype),
        grid_spec=pltpu.PrefetchScalarGridSpec(
            num_scalar_prefetch=0,
            grid=grid,
            in_specs=[
                pl.BlockSpec((rows, TVp), lambda i: (i, 0)),
                pl.BlockSpec((TVp, TVp), lambda i: (0, 0)),
                w_spec,
                pl.BlockSpec((C_out, TVp), lambda i: (0, 0)),
            ],
            out_specs=pl.BlockSpec((nb, C_out, TVp), lambda i: (i, 0, 0)),
        ),
        compiler_params=pltpu.CompilerParams(
            dimension_semantics=("parallel",),
            vmem_limit_bytes=(64 << 20) if vmem_cap >= (100 << 20) else (32 << 20),
        ),
    )(x_flat, a_blk, w_f, b_bcast)

    out = out[:N, :, :TV]
    return out.reshape(N, C_out, T, V)


if __name__ == "__main__":
    # Small shapes consistent with the module: batch=2, C_in=4, C_out=8,
    # T=8 frames, V=16 graph nodes (T*V = 128 -> lane-dense output slab).
    N, C_IN, C_OUT, T, V = 2, 4, 8, 8, 16

    key = jax.random.PRNGKey(0)
    kx, ka, kw, kb = jax.random.split(key, 4)

    x = jax.random.normal(kx, (N, C_IN, T, V), dtype=jnp.float32)
    A = jax.random.normal(ka, (V, V), dtype=jnp.float32)
    # Conv2d(C_in, C_out, kernel_size=(1,1)) weight (C_out, C_in, 1, 1) -> squeezed.
    w = jax.random.normal(kw, (C_OUT, C_IN), dtype=jnp.float32) * 0.1
    b = jax.random.normal(kb, (C_OUT,), dtype=jnp.float32) * 0.1

    out = graph_conv(x, A, w, b)
    out = jax.block_until_ready(out)

    # Pure-JAX reference of the PyTorch forward.  x/A are rounded to bf16 to
    # match the kernel's MXU inputs; everything else stays f32 (matches the
    # kernel's f32 accumulation and f32 VPU channel mix / bias add).
    xb = x.astype(jnp.bfloat16).astype(jnp.float32)
    Ab = A.astype(jnp.bfloat16).astype(jnp.float32)
    ref = jnp.einsum('nctv,vw->nctw', xb, Ab,
                     precision=jax.lax.Precision.HIGHEST)
    ref = jnp.einsum('oc,nctw->notw', w, ref,
                     precision=jax.lax.Precision.HIGHEST) + b[None, :, None, None]

    assert out.shape == (N, C_OUT, T, V)
    assert jnp.allclose(out, ref, atol=2e-3, rtol=2e-3)
    print("KERNEL_OK")
</pallas_src>

<mosaic_0001>
module attributes {stable_mosaic.version = 11 : i64} {
  func.func @graph_conv_kernel(%arg0: i32, %arg1: memref<8x128xbf16, #tpu.memory_space<vmem>>, %arg2: memref<128x128xbf16, #tpu.memory_space<vmem>>, %arg3: memref<8x4xf32, #tpu.memory_space<smem>>, %arg4: memref<8x128xf32, #tpu.memory_space<vmem>>, %arg5: memref<2x8x128xf32, #tpu.memory_space<vmem>>) attributes {dimension_semantics = [#tpu.dimension_semantics<parallel>], iteration_bounds = array<i64: 1>, scalar_prefetch = 0 : i64, scratch_operands = 0 : i64, tpu.core_type = #tpu.core_type<tc>, window_params = [{transform_indices = @transform_0, window_bounds = array<i64: 8, 128>}, {pipeline_mode = #tpu.pipeline_mode<synchronous>, transform_indices = @transform_1, window_bounds = array<i64: 128, 128>}, {transform_indices = @transform_2, window_bounds = array<i64: 8, 4>}, {pipeline_mode = #tpu.pipeline_mode<synchronous>, transform_indices = @transform_3, window_bounds = array<i64: 8, 128>}, {transform_indices = @transform_4, window_bounds = array<i64: 2, 8, 128>}]} {
    %c0 = arith.constant 0 : index
    %c0_0 = arith.constant 0 : index
    %0 = vector.load %arg1[%c0, %c0_0] : memref<8x128xbf16, #tpu.memory_space<vmem>>, vector<8x128xbf16>
    %c0_1 = arith.constant 0 : index
    %c0_2 = arith.constant 0 : index
    %1 = vector.load %arg2[%c0_1, %c0_2] : memref<128x128xbf16, #tpu.memory_space<vmem>>, vector<128x128xbf16>
    %cst = arith.constant dense<0.000000e+00> : vector<8x128xf32>
    %2 = tpu.matmul %0, %1, %cst {dimension_numbers = #tpu.dot_dimension_numbers<[1], [0], [0], [1], [0, 0, 1, 1], [], []>} : vector<8x128xbf16>, vector<128x128xbf16>, vector<8x128xf32> -> vector<8x128xf32>
    %c0_3 = arith.constant 0 : index
    %c0_4 = arith.constant 0 : index
    %3 = vector.load %arg4[%c0_3, %c0_4] : memref<8x128xf32, #tpu.memory_space<vmem>>, vector<8x128xf32>
    %4 = vector.extract_strided_slice %2 {offsets = [0, 0], sizes = [4, 128], strides = [1, 1]} : vector<8x128xf32> to vector<4x128xf32>
    %5 = vector.extract_strided_slice %4 {offsets = [0, 0], sizes = [1, 128], strides = [1, 1]} : vector<4x128xf32> to vector<1x128xf32>
    %c0_5 = arith.constant 0 : index
    %c0_6 = arith.constant 0 : index
    %6 = memref.load %arg3[%c0_5, %c0_6] : memref<8x4xf32, #tpu.memory_space<smem>>
    %7 = vector.broadcast %6 : f32 to vector<1x128xf32>
    %8 = arith.mulf %5, %7 : vector<1x128xf32>
    %9 = vector.extract_strided_slice %3 {offsets = [0, 0], sizes = [1, 128], strides = [1, 1]} : vector<8x128xf32> to vector<1x128xf32>
    %10 = arith.addf %8, %9 : vector<1x128xf32>
    %11 = vector.extract_strided_slice %4 {offsets = [1, 0], sizes = [1, 128], strides = [1, 1]} : vector<4x128xf32> to vector<1x128xf32>
    %c0_7 = arith.constant 0 : index
    %c1 = arith.constant 1 : index
    %12 = memref.load %arg3[%c0_7, %c1] : memref<8x4xf32, #tpu.memory_space<smem>>
    %13 = vector.broadcast %12 : f32 to vector<1x128xf32>
    %14 = arith.mulf %11, %13 : vector<1x128xf32>
    %15 = vector.extract_strided_slice %4 {offsets = [2, 0], sizes = [1, 128], strides = [1, 1]} : vector<4x128xf32> to vector<1x128xf32>
    %c0_8 = arith.constant 0 : index
    %c2 = arith.constant 2 : index
    %16 = memref.load %arg3[%c0_8, %c2] : memref<8x4xf32, #tpu.memory_space<smem>>
    %17 = vector.broadcast %16 : f32 to vector<1x128xf32>
    %18 = arith.mulf %15, %17 : vector<1x128xf32>
    %19 = arith.addf %10, %18 : vector<1x128xf32>
    %20 = vector.extract_strided_slice %4 {offsets = [3, 0], sizes = [1, 128], strides = [1, 1]} : vector<4x128xf32> to vector<1x128xf32>
    %c0_9 = arith.constant 0 : index
    %c3 = arith.constant 3 : index
    %21 = memref.load %arg3[%c0_9, %c3] : memref<8x4xf32, #tpu.memory_space<smem>>
    %22 = vector.broadcast %21 : f32 to vector<1x128xf32>
    %23 = arith.mulf %20, %22 : vector<1x128xf32>
    %24 = arith.addf %14, %23 : vector<1x128xf32>
    %25 = arith.addf %19, %24 : vector<1x128xf32>
    %c0_10 = arith.constant 0 : index
    %c0_11 = arith.constant 0 : index
    %c0_12 = arith.constant 0 : index
    %26 = vector.load %arg5[%c0_10, %c0_11, %c0_12] : memref<2x8x128xf32, #tpu.memory_space<vmem>>, vector<1x1x128xf32>
    %27 = vector.shape_cast %26 : vector<1x1x128xf32> to vector<1x128xf32>
    %28 = vector.shape_cast %25 : vector<1x128xf32> to vector<1x1x128xf32>
    tpu.vector_store %arg5[%c0_10, %c0_11, %c0_12], %28 {strides = array<i32>} : memref<2x8x128xf32, #tpu.memory_space<vmem>>, vector<1x1x128xf32>,
    %29 = vector.extract_strided_slice %4 {offsets = [0, 0], sizes = [1, 128], strides = [1, 1]} : vector<4x128xf32> to vector<1x128xf32>
    %c1_13 = arith.constant 1 : index
    %c0_14 = arith.constant 0 : index
    %30 = memref.load %arg3[%c1_13, %c0_14] : memref<8x4xf32, #tpu.memory_space<smem>>
    %31 = vector.broadcast %30 : f32 to vector<1x128xf32>
    %32 = arith.mulf %29, %31 : vector<1x128xf32>
    %33 = vector.extract_strided_slice %3 {offsets = [1, 0], sizes = [1, 128], strides = [1, 1]} : vector<8x128xf32> to vector<1x128xf32>
    %34 = arith.addf %32, %33 : vector<1x128xf32>
    %35 = vector.extract_strided_slice %4 {offsets = [1, 0], sizes = [1, 128], strides = [1, 1]} : vector<4x128xf32> to vector<1x128xf32>
    %c1_15 = arith.constant 1 : index
    %c1_16 = arith.constant 1 : index
    %36 = memref.load %arg3[%c1_15, %c1_16] : memref<8x4xf32, #tpu.memory_space<smem>>
    %37 = vector.broadcast %36 : f32 to vector<1x128xf32>
    %38 = arith.mulf %35, %37 : vector<1x128xf32>
    %39 = vector.extract_strided_slice %4 {offsets = [2, 0], sizes = [1, 128], strides = [1, 1]} : vector<4x128xf32> to vector<1x128xf32>
    %c1_17 = arith.constant 1 : index
    %c2_18 = arith.constant 2 : index
    %40 = memref.load %arg3[%c1_17, %c2_18] : memref<8x4xf32, #tpu.memory_space<smem>>
    %41 = vector.broadcast %40 : f32 to vector<1x128xf32>
    %42 = arith.mulf %39, %41 : vector<1x128xf32>
    %43 = arith.addf %34, %42 : vector<1x128xf32>
    %44 = vector.extract_strided_slice %4 {offsets = [3, 0], sizes = [1, 128], strides = [1, 1]} : vector<4x128xf32> to vector<1x128xf32>
    %c1_19 = arith.constant 1 : index
    %c3_20 = arith.constant 3 : index
    %45 = memref.load %arg3[%c1_19, %c3_20] : memref<8x4xf32, #tpu.memory_space<smem>>
    %46 = vector.broadcast %45 : f32 to vector<1x128xf32>
    %47 = arith.mulf %44, %46 : vector<1x128xf32>
    %48 = arith.addf %38, %47 : vector<1x128xf32>
    %49 = arith.addf %43, %48 : vector<1x128xf32>
    %c0_21 = arith.constant 0 : index
    %c1_22 = arith.constant 1 : index
    %c0_23 = arith.constant 0 : index
    %50 = vector.load %arg5[%c0_21, %c1_22, %c0_23] : memref<2x8x128xf32, #tpu.memory_space<vmem>>, vector<1x1x128xf32>
    %51 = vector.shape_cast %50 : vector<1x1x128xf32> to vector<1x128xf32>
    %52 = vector.shape_cast %49 : vector<1x128xf32> to vector<1x1x128xf32>
    tpu.vector_store %arg5[%c0_21, %c1_22, %c0_23], %52 {strides = array<i32>} : memref<2x8x128xf32, #tpu.memory_space<vmem>>, vector<1x1x128xf32>,
    %53 = vector.extract_strided_slice %4 {offsets = [0, 0], sizes = [1, 128], strides = [1, 1]} : vector<4x128xf32> to vector<1x128xf32>
    %c2_24 = arith.constant 2 : index
    %c0_25 = arith.constant 0 : index
    %54 = memref.load %arg3[%c2_24, %c0_25] : memref<8x4xf32, #tpu.memory_space<smem>>
    %55 = vector.broadcast %54 : f32 to vector<1x128xf32>
    %56 = arith.mulf %53, %55 : vector<1x128xf32>
    %57 = vector.extract_strided_slice %3 {offsets = [2, 0], sizes = [1, 128], strides = [1, 1]} : vector<8x128xf32> to vector<1x128xf32>
    %58 = arith.addf %56, %57 : vector<1x128xf32>
    %59 = vector.extract_strided_slice %4 {offsets = [1, 0], sizes = [1, 128], strides = [1, 1]} : vector<4x128xf32> to vector<1x128xf32>
    %c2_26 = arith.constant 2 : index
    %c1_27 = arith.constant 1 : index
    %60 = memref.load %arg3[%c2_26, %c1_27] : memref<8x4xf32, #tpu.memory_space<smem>>
    %61 = vector.broadcast %60 : f32 to vector<1x128xf32>
    %62 = arith.mulf %59, %61 : vector<1x128xf32>
    %63 = vector.extract_strided_slice %4 {offsets = [2, 0], sizes = [1, 128], strides = [1, 1]} : vector<4x128xf32> to vector<1x128xf32>
    %c2_28 = arith.constant 2 : index
    %c2_29 = arith.constant 2 : index
    %64 = memref.load %arg3[%c2_28, %c2_29] : memref<8x4xf32, #tpu.memory_space<smem>>
    %65 = vector.broadcast %64 : f32 to vector<1x128xf32>
    %66 = arith.mulf %63, %65 : vector<1x128xf32>
    %67 = arith.addf %58, %66 : vector<1x128xf32>
    %68 = vector.extract_strided_slice %4 {offsets = [3, 0], sizes = [1, 128], strides = [1, 1]} : vector<4x128xf32> to vector<1x128xf32>
    %c2_30 = arith.constant 2 : index
    %c3_31 = arith.constant 3 : index
    %69 = memref.load %arg3[%c2_30, %c3_31] : memref<8x4xf32, #tpu.memory_space<smem>>
    %70 = vector.broadcast %69 : f32 to vector<1x128xf32>
    %71 = arith.mulf %68, %70 : vector<1x128xf32>
    %72 = arith.addf %62, %71 : vector<1x128xf32>
    %73 = arith.addf %67, %72 : vector<1x128xf32>
    %c0_32 = arith.constant 0 : index
    %c2_33 = arith.constant 2 : index
    %c0_34 = arith.constant 0 : index
    %74 = vector.load %arg5[%c0_32, %c2_33, %c0_34] : memref<2x8x128xf32, #tpu.memory_space<vmem>>, vector<1x1x128xf32>
    %75 = vector.shape_cast %74 : vector<1x1x128xf32> to vector<1x128xf32>
    %76 = vector.shape_cast %73 : vector<1x128xf32> to vector<1x1x128xf32>
    tpu.vector_store %arg5[%c0_32, %c2_33, %c0_34], %76 {strides = array<i32>} : memref<2x8x128xf32, #tpu.memory_space<vmem>>, vector<1x1x128xf32>,
    %77 = vector.extract_strided_slice %4 {offsets = [0, 0], sizes = [1, 128], strides = [1, 1]} : vector<4x128xf32> to vector<1x128xf32>
    %c3_35 = arith.constant 3 : index
    %c0_36 = arith.constant 0 : index
    %78 = memref.load %arg3[%c3_35, %c0_36] : memref<8x4xf32, #tpu.memory_space<smem>>
    %79 = vector.broadcast %78 : f32 to vector<1x128xf32>
    %80 = arith.mulf %77, %79 : vector<1x128xf32>
    %81 = vector.extract_strided_slice %3 {offsets = [3, 0], sizes = [1, 128], strides = [1, 1]} : vector<8x128xf32> to vector<1x128xf32>
    %82 = arith.addf %80, %81 : vector<1x128xf32>
    %83 = vector.extract_strided_slice %4 {offsets = [1, 0], sizes = [1, 128], strides = [1, 1]} : vector<4x128xf32> to vector<1x128xf32>
    %c3_37 = arith.constant 3 : index
    %c1_38 = arith.constant 1 : index
    %84 = memref.load %arg3[%c3_37, %c1_38] : memref<8x4xf32, #tpu.memory_space<smem>>
    %85 = vector.broadcast %84 : f32 to vector<1x128xf32>
    %86 = arith.mulf %83, %85 : vector<1x128xf32>
    %87 = vector.extract_strided_slice %4 {offsets = [2, 0], sizes = [1, 128], strides = [1, 1]} : vector<4x128xf32> to vector<1x128xf32>
    %c3_39 = arith.constant 3 : index
    %c2_40 = arith.constant 2 : index
    %88 = memref.load %arg3[%c3_39, %c2_40] : memref<8x4xf32, #tpu.memory_space<smem>>
    %89 = vector.broadcast %88 : f32 to vector<1x128xf32>
    %90 = arith.mulf %87, %89 : vector<1x128xf32>
    %91 = arith.addf %82, %90 : vector<1x128xf32>
    %92 = vector.extract_strided_slice %4 {offsets = [3, 0], sizes = [1, 128], strides = [1, 1]} : vector<4x128xf32> to vector<1x128xf32>
    %c3_41 = arith.constant 3 : index
    %c3_42 = arith.constant 3 : index
    %93 = memref.load %arg3[%c3_41, %c3_42] : memref<8x4xf32, #tpu.memory_space<smem>>
    %94 = vector.broadcast %93 : f32 to vector<1x128xf32>
    %95 = arith.mulf %92, %94 : vector<1x128xf32>
    %96 = arith.addf %86, %95 : vector<1x128xf32>
    %97 = arith.addf %91, %96 : vector<1x128xf32>
    %c0_43 = arith.constant 0 : index
    %c3_44 = arith.constant 3 : index
    %c0_45 = arith.constant 0 : index
    %98 = vector.load %arg5[%c0_43, %c3_44, %c0_45] : memref<2x8x128xf32, #tpu.memory_space<vmem>>, vector<1x1x128xf32>
    %99 = vector.shape_cast %98 : vector<1x1x128xf32> to vector<1x128xf32>
    %100 = vector.shape_cast %97 : vector<1x128xf32> to vector<1x1x128xf32>
    tpu.vector_store %arg5[%c0_43, %c3_44, %c0_45], %100 {strides = array<i32>} : memref<2x8x128xf32, #tpu.memory_space<vmem>>, vector<1x1x128xf32>,
    %101 = vector.extract_strided_slice %4 {offsets = [0, 0], sizes = [1, 128], strides = [1, 1]} : vector<4x128xf32> to vector<1x128xf32>
    %c4 = arith.constant 4 : index
    %c0_46 = arith.constant 0 : index
    %102 = memref.load %arg3[%c4, %c0_46] : memref<8x4xf32, #tpu.memory_space<smem>>
    %103 = vector.broadcast %102 : f32 to vector<1x128xf32>
    %104 = arith.mulf %101, %103 : vector<1x128xf32>
    %105 = vector.extract_strided_slice %3 {offsets = [4, 0], sizes = [1, 128], strides = [1, 1]} : vector<8x128xf32> to vector<1x128xf32>
    %106 = arith.addf %104, %105 : vector<1x128xf32>
    %107 = vector.extract_strided_slice %4 {offsets = [1, 0], sizes = [1, 128], strides = [1, 1]} : vector<4x128xf32> to vector<1x128xf32>
    %c4_47 = arith.constant 4 : index
    %c1_48 = arith.constant 1 : index
    %108 = memref.load %arg3[%c4_47, %c1_48] : memref<8x4xf32, #tpu.memory_space<smem>>
    %109 = vector.broadcast %108 : f32 to vector<1x128xf32>
    %110 = arith.mulf %107, %109 : vector<1x128xf32>
    %111 = vector.extract_strided_slice %4 {offsets = [2, 0], sizes = [1, 128], strides = [1, 1]} : vector<4x128xf32> to vector<1x128xf32>
    %c4_49 = arith.constant 4 : index
    %c2_50 = arith.constant 2 : index
    %112 = memref.load %arg3[%c4_49, %c2_50] : memref<8x4xf32, #tpu.memory_space<smem>>
    %113 = vector.broadcast %112 : f32 to vector<1x128xf32>
    %114 = arith.mulf %111, %113 : vector<1x128xf32>
    %115 = arith.addf %106, %114 : vector<1x128xf32>
    %116 = vector.extract_strided_slice %4 {offsets = [3, 0], sizes = [1, 128], strides = [1, 1]} : vector<4x128xf32> to vector<1x128xf32>
    %c4_51 = arith.constant 4 : index
    %c3_52 = arith.constant 3 : index
    %117 = memref.load %arg3[%c4_51, %c3_52] : memref<8x4xf32, #tpu.memory_space<smem>>
    %118 = vector.broadcast %117 : f32 to vector<1x128xf32>
    %119 = arith.mulf %116, %118 : vector<1x128xf32>
    %120 = arith.addf %110, %119 : vector<1x128xf32>
    %121 = arith.addf %115, %120 : vector<1x128xf32>
    %c0_53 = arith.constant 0 : index
    %c4_54 = arith.constant 4 : index
    %c0_55 = arith.constant 0 : index
    %122 = vector.load %arg5[%c0_53, %c4_54, %c0_55] : memref<2x8x128xf32, #tpu.memory_space<vmem>>, vector<1x1x128xf32>
    %123 = vector.shape_cast %122 : vector<1x1x128xf32> to vector<1x128xf32>
    %124 = vector.shape_cast %121 : vector<1x128xf32> to vector<1x1x128xf32>
    tpu.vector_store %arg5[%c0_53, %c4_54, %c0_55], %124 {strides = array<i32>} : memref<2x8x128xf32, #tpu.memory_space<vmem>>, vector<1x1x128xf32>,
    %125 = vector.extract_strided_slice %4 {offsets = [0, 0], sizes = [1, 128], strides = [1, 1]} : vector<4x128xf32> to vector<1x128xf32>
    %c5 = arith.constant 5 : index
    %c0_56 = arith.constant 0 : index
    %126 = memref.load %arg3[%c5, %c0_56] : memref<8x4xf32, #tpu.memory_space<smem>>
    %127 = vector.broadcast %126 : f32 to vector<1x128xf32>
    %128 = arith.mulf %125, %127 : vector<1x128xf32>
    %129 = vector.extract_strided_slice %3 {offsets = [5, 0], sizes = [1, 128], strides = [1, 1]} : vector<8x128xf32> to vector<1x128xf32>
    %130 = arith.addf %128, %129 : vector<1x128xf32>
    %131 = vector.extract_strided_slice %4 {offsets = [1, 0], sizes = [1, 128], strides = [1, 1]} : vector<4x128xf32> to vector<1x128xf32>
    %c5_57 = arith.constant 5 : index
    %c1_58 = arith.constant 1 : index
    %132 = memref.load %arg3[%c5_57, %c1_58] : memref<8x4xf32, #tpu.memory_space<smem>>
    %133 = vector.broadcast %132 : f32 to vector<1x128xf32>
    %134 = arith.mulf %131, %133 : vector<1x128xf32>
    %135 = vector.extract_strided_slice %4 {offsets = [2, 0], sizes = [1, 128], strides = [1, 1]} : vector<4x128xf32> to vector<1x128xf32>
    %c5_59 = arith.constant 5 : index
    %c2_60 = arith.constant 2 : index
    %136 = memref.load %arg3[%c5_59, %c2_60] : memref<8x4xf32, #tpu.memory_space<smem>>
    %137 = vector.broadcast %136 : f32 to vector<1x128xf32>
    %138 = arith.mulf %135, %137 : vector<1x128xf32>
    %139 = arith.addf %130, %138 : vector<1x128xf32>
    %140 = vector.extract_strided_slice %4 {offsets = [3, 0], sizes = [1, 128], strides = [1, 1]} : vector<4x128xf32> to vector<1x128xf32>
    %c5_61 = arith.constant 5 : index
    %c3_62 = arith.constant 3 : index
    %141 = memref.load %arg3[%c5_61, %c3_62] : memref<8x4xf32, #tpu.memory_space<smem>>
    %142 = vector.broadcast %141 : f32 to vector<1x128xf32>
    %143 = arith.mulf %140, %142 : vector<1x128xf32>
    %144 = arith.addf %134, %143 : vector<1x128xf32>
    %145 = arith.addf %139, %144 : vector<1x128xf32>
    %c0_63 = arith.constant 0 : index
    %c5_64 = arith.constant 5 : index
    %c0_65 = arith.constant 0 : index
    %146 = vector.load %arg5[%c0_63, %c5_64, %c0_65] : memref<2x8x128xf32, #tpu.memory_space<vmem>>, vector<1x1x128xf32>
    %147 = vector.shape_cast %146 : vector<1x1x128xf32> to vector<1x128xf32>
    %148 = vector.shape_cast %145 : vector<1x128xf32> to vector<1x1x128xf32>
    tpu.vector_store %arg5[%c0_63, %c5_64, %c0_65], %148 {strides = array<i32>} : memref<2x8x128xf32, #tpu.memory_space<vmem>>, vector<1x1x128xf32>,
    %149 = vector.extract_strided_slice %4 {offsets = [0, 0], sizes = [1, 128], strides = [1, 1]} : vector<4x128xf32> to vector<1x128xf32>
    %c6 = arith.constant 6 : index
    %c0_66 = arith.constant 0 : index
    %150 = memref.load %arg3[%c6, %c0_66] : memref<8x4xf32, #tpu.memory_space<smem>>
    %151 = vector.broadcast %150 : f32 to vector<1x128xf32>
    %152 = arith.mulf %149, %151 : vector<1x128xf32>
    %153 = vector.extract_strided_slice %3 {offsets = [6, 0], sizes = [1, 128], strides = [1, 1]} : vector<8x128xf32> to vector<1x128xf32>
    %154 = arith.addf %152, %153 : vector<1x128xf32>
    %155 = vector.extract_strided_slice %4 {offsets = [1, 0], sizes = [1, 128], strides = [1, 1]} : vector<4x128xf32> to vector<1x128xf32>
    %c6_67 = arith.constant 6 : index
    %c1_68 = arith.constant 1 : index
    %156 = memref.load %arg3[%c6_67, %c1_68] : memref<8x4xf32, #tpu.memory_space<smem>>
    %157 = vector.broadcast %156 : f32 to vector<1x128xf32>
    %158 = arith.mulf %155, %157 : vector<1x128xf32>
    %159 = vector.extract_strided_slice %4 {offsets = [2, 0], sizes = [1, 128], strides = [1, 1]} : vector<4x128xf32> to vector<1x128xf32>
    %c6_69 = arith.constant 6 : index
    %c2_70 = arith.constant 2 : index
    %160 = memref.load %arg3[%c6_69, %c2_70] : memref<8x4xf32, #tpu.memory_space<smem>>
    %161 = vector.broadcast %160 : f32 to vector<1x128xf32>
    %162 = arith.mulf %159, %161 : vector<1x128xf32>
    %163 = arith.addf %154, %162 : vector<1x128xf32>
    %164 = vector.extract_strided_slice %4 {offsets = [3, 0], sizes = [1, 128], strides = [1, 1]} : vector<4x128xf32> to vector<1x128xf32>
    %c6_71 = arith.constant 6 : index
    %c3_72 = arith.constant 3 : index
    %165 = memref.load %arg3[%c6_71, %c3_72] : memref<8x4xf32, #tpu.memory_space<smem>>
    %166 = vector.broadcast %165 : f32 to vector<1x128xf32>
    %167 = arith.mulf %164, %166 : vector<1x128xf32>
    %168 = arith.addf %158, %167 : vector<1x128xf32>
    %169 = arith.addf %163, %168 : vector<1x128xf32>
    %c0_73 = arith.constant 0 : index
    %c6_74 = arith.constant 6 : index
    %c0_75 = arith.constant 0 : index
    %170 = vector.load %arg5[%c0_73, %c6_74, %c0_75] : memref<2x8x128xf32, #tpu.memory_space<vmem>>, vector<1x1x128xf32>
    %171 = vector.shape_cast %170 : vector<1x1x128xf32> to vector<1x128xf32>
    %172 = vector.shape_cast %169 : vector<1x128xf32> to vector<1x1x128xf32>
    tpu.vector_store %arg5[%c0_73, %c6_74, %c0_75], %172 {strides = array<i32>} : memref<2x8x128xf32, #tpu.memory_space<vmem>>, vector<1x1x128xf32>,
    %173 = vector.extract_strided_slice %4 {offsets = [0, 0], sizes = [1, 128], strides = [1, 1]} : vector<4x128xf32> to vector<1x128xf32>
    %c7 = arith.constant 7 : index
    %c0_76 = arith.constant 0 : index
    %174 = memref.load %arg3[%c7, %c0_76] : memref<8x4xf32, #tpu.memory_space<smem>>
    %175 = vector.broadcast %174 : f32 to vector<1x128xf32>
    %176 = arith.mulf %173, %175 : vector<1x128xf32>
    %177 = vector.extract_strided_slice %3 {offsets = [7, 0], sizes = [1, 128], strides = [1, 1]} : vector<8x128xf32> to vector<1x128xf32>
    %178 = arith.addf %176, %177 : vector<1x128xf32>
    %179 = vector.extract_strided_slice %4 {offsets = [1, 0], sizes = [1, 128], strides = [1, 1]} : vector<4x128xf32> to vector<1x128xf32>
    %c7_77 = arith.constant 7 : index
    %c1_78 = arith.constant 1 : index
    %180 = memref.load %arg3[%c7_77, %c1_78] : memref<8x4xf32, #tpu.memory_space<smem>>
    %181 = vector.broadcast %180 : f32 to vector<1x128xf32>
    %182 = arith.mulf %179, %181 : vector<1x128xf32>
    %183 = vector.extract_strided_slice %4 {offsets = [2, 0], sizes = [1, 128], strides = [1, 1]} : vector<4x128xf32> to vector<1x128xf32>
    %c7_79 = arith.constant 7 : index
    %c2_80 = arith.constant 2 : index
    %184 = memref.load %arg3[%c7_79, %c2_80] : memref<8x4xf32, #tpu.memory_space<smem>>
    %185 = vector.broadcast %184 : f32 to vector<1x128xf32>
    %186 = arith.mulf %183, %185 : vector<1x128xf32>
    %187 = arith.addf %178, %186 : vector<1x128xf32>
    %188 = vector.extract_strided_slice %4 {offsets = [3, 0], sizes = [1, 128], strides = [1, 1]} : vector<4x128xf32> to vector<1x128xf32>
    %c7_81 = arith.constant 7 : index
    %c3_82 = arith.constant 3 : index
    %189 = memref.load %arg3[%c7_81, %c3_82] : memref<8x4xf32, #tpu.memory_space<smem>>
    %190 = vector.broadcast %189 : f32 to vector<1x128xf32>
    %191 = arith.mulf %188, %190 : vector<1x128xf32>
    %192 = arith.addf %182, %191 : vector<1x128xf32>
    %193 = arith.addf %187, %192 : vector<1x128xf32>
    %c0_83 = arith.constant 0 : index
    %c7_84 = arith.constant 7 : index
    %c0_85 = arith.constant 0 : index
    %194 = vector.load %arg5[%c0_83, %c7_84, %c0_85] : memref<2x8x128xf32, #tpu.memory_space<vmem>>, vector<1x1x128xf32>
    %195 = vector.shape_cast %194 : vector<1x1x128xf32> to vector<1x128xf32>
    %196 = vector.shape_cast %193 : vector<1x128xf32> to vector<1x1x128xf32>
    tpu.vector_store %arg5[%c0_83, %c7_84, %c0_85], %196 {strides = array<i32>} : memref<2x8x128xf32, #tpu.memory_space<vmem>>, vector<1x1x128xf32>,
    %197 = vector.extract_strided_slice %2 {offsets = [4, 0], sizes = [4, 128], strides = [1, 1]} : vector<8x128xf32> to vector<4x128xf32>
    %198 = vector.extract_strided_slice %197 {offsets = [0, 0], sizes = [1, 128], strides = [1, 1]} : vector<4x128xf32> to vector<1x128xf32>
    %c0_86 = arith.constant 0 : index
    %c0_87 = arith.constant 0 : index
    %199 = memref.load %arg3[%c0_86, %c0_87] : memref<8x4xf32, #tpu.memory_space<smem>>
    %200 = vector.broadcast %199 : f32 to vector<1x128xf32>
    %201 = arith.mulf %198, %200 : vector<1x128xf32>
    %202 = vector.extract_strided_slice %3 {offsets = [0, 0], sizes = [1, 128], strides = [1, 1]} : vector<8x128xf32> to vector<1x128xf32>
    %203 = arith.addf %201, %202 : vector<1x128xf32>
    %204 = vector.extract_strided_slice %197 {offsets = [1, 0], sizes = [1, 128], strides = [1, 1]} : vector<4x128xf32> to vector<1x128xf32>
    %c0_88 = arith.constant 0 : index
    %c1_89 = arith.constant 1 : index
    %205 = memref.load %arg3[%c0_88, %c1_89] : memref<8x4xf32, #tpu.memory_space<smem>>
    %206 = vector.broadcast %205 : f32 to vector<1x128xf32>
    %207 = arith.mulf %204, %206 : vector<1x128xf32>
    %208 = vector.extract_strided_slice %197 {offsets = [2, 0], sizes = [1, 128], strides = [1, 1]} : vector<4x128xf32> to vector<1x128xf32>
    %c0_90 = arith.constant 0 : index
    %c2_91 = arith.constant 2 : index
    %209 = memref.load %arg3[%c0_90, %c2_91] : memref<8x4xf32, #tpu.memory_space<smem>>
    %210 = vector.broadcast %209 : f32 to vector<1x128xf32>
    %211 = arith.mulf %208, %210 : vector<1x128xf32>
    %212 = arith.addf %203, %211 : vector<1x128xf32>
    %213 = vector.extract_strided_slice %197 {offsets = [3, 0], sizes = [1, 128], strides = [1, 1]} : vector<4x128xf32> to vector<1x128xf32>
    %c0_92 = arith.constant 0 : index
    %c3_93 = arith.constant 3 : index
    %214 = memref.load %arg3[%c0_92, %c3_93] : memref<8x4xf32, #tpu.memory_space<smem>>
    %215 = vector.broadcast %214 : f32 to vector<1x128xf32>
    %216 = arith.mulf %213, %215 : vector<1x128xf32>
    %217 = arith.addf %207, %216 : vector<1x128xf32>
    %218 = arith.addf %212, %217 : vector<1x128xf32>
    %c1_94 = arith.constant 1 : index
    %c0_95 = arith.constant 0 : index
    %c0_96 = arith.constant 0 : index
    %219 = vector.load %arg5[%c1_94, %c0_95, %c0_96] : memref<2x8x128xf32, #tpu.memory_space<vmem>>, vector<1x1x128xf32>
    %220 = vector.shape_cast %219 : vector<1x1x128xf32> to vector<1x128xf32>
    %221 = vector.shape_cast %218 : vector<1x128xf32> to vector<1x1x128xf32>
    tpu.vector_store %arg5[%c1_94, %c0_95, %c0_96], %221 {strides = array<i32>} : memref<2x8x128xf32, #tpu.memory_space<vmem>>, vector<1x1x128xf32>,
    %222 = vector.extract_strided_slice %197 {offsets = [0, 0], sizes = [1, 128], strides = [1, 1]} : vector<4x128xf32> to vector<1x128xf32>
    %c1_97 = arith.constant 1 : index
    %c0_98 = arith.constant 0 : index
    %223 = memref.load %arg3[%c1_97, %c0_98] : memref<8x4xf32, #tpu.memory_space<smem>>
    %224 = vector.broadcast %223 : f32 to vector<1x128xf32>
    %225 = arith.mulf %222, %224 : vector<1x128xf32>
    %226 = vector.extract_strided_slice %3 {offsets = [1, 0], sizes = [1, 128], strides = [1, 1]} : vector<8x128xf32> to vector<1x128xf32>
    %227 = arith.addf %225, %226 : vector<1x128xf32>
    %228 = vector.extract_strided_slice %197 {offsets = [1, 0], sizes = [1, 128], strides = [1, 1]} : vector<4x128xf32> to vector<1x128xf32>
    %c1_99 = arith.constant 1 : index
    %c1_100 = arith.constant 1 : index
    %229 = memref.load %arg3[%c1_99, %c1_100] : memref<8x4xf32, #tpu.memory_space<smem>>
    %230 = vector.broadcast %229 : f32 to vector<1x128xf32>
    %231 = arith.mulf %228, %230 : vector<1x128xf32>
    %232 = vector.extract_strided_slice %197 {offsets = [2, 0], sizes = [1, 128], strides = [1, 1]} : vector<4x128xf32> to vector<1x128xf32>
    %c1_101 = arith.constant 1 : index
    %c2_102 = arith.constant 2 : index
    %233 = memref.load %arg3[%c1_101, %c2_102] : memref<8x4xf32, #tpu.memory_space<smem>>
    %234 = vector.broadcast %233 : f32 to vector<1x128xf32>
    %235 = arith.mulf %232, %234 : vector<1x128xf32>
    %236 = arith.addf %227, %235 : vector<1x128xf32>
    %237 = vector.extract_strided_slice %197 {offsets = [3, 0], sizes = [1, 128], strides = [1, 1]} : vector<4x128xf32> to vector<1x128xf32>
    %c1_103 = arith.constant 1 : index
    %c3_104 = arith.constant 3 : index
    %238 = memref.load %arg3[%c1_103, %c3_104] : memref<8x4xf32, #tpu.memory_space<smem>>
    %239 = vector.broadcast %238 : f32 to vector<1x128xf32>
    %240 = arith.mulf %237, %239 : vector<1x128xf32>
    %241 = arith.addf %231, %240 : vector<1x128xf32>
    %242 = arith.addf %236, %241 : vector<1x128xf32>
    %c1_105 = arith.constant 1 : index
    %c1_106 = arith.constant 1 : index
    %c0_107 = arith.constant 0 : index
    %243 = vector.load %arg5[%c1_105, %c1_106, %c0_107] : memref<2x8x128xf32, #tpu.memory_space<vmem>>, vector<1x1x128xf32>
    %244 = vector.shape_cast %243 : vector<1x1x128xf32> to vector<1x128xf32>
    %245 = vector.shape_cast %242 : vector<1x128xf32> to vector<1x1x128xf32>
    tpu.vector_store %arg5[%c1_105, %c1_106, %c0_107], %245 {strides = array<i32>} : memref<2x8x128xf32, #tpu.memory_space<vmem>>, vector<1x1x128xf32>,
    %246 = vector.extract_strided_slice %197 {offsets = [0, 0], sizes = [1, 128], strides = [1, 1]} : vector<4x128xf32> to vector<1x128xf32>
    %c2_108 = arith.constant 2 : index
    %c0_109 = arith.constant 0 : index
    %247 = memref.load %arg3[%c2_108, %c0_109] : memref<8x4xf32, #tpu.memory_space<smem>>
    %248 = vector.broadcast %247 : f32 to vector<1x128xf32>
    %249 = arith.mulf %246, %248 : vector<1x128xf32>
    %250 = vector.extract_strided_slice %3 {offsets = [2, 0], sizes = [1, 128], strides = [1, 1]} : vector<8x128xf32> to vector<1x128xf32>
    %251 = arith.addf %249, %250 : vector<1x128xf32>
    %252 = vector.extract_strided_slice %197 {offsets = [1, 0], sizes = [1, 128], strides = [1, 1]} : vector<4x128xf32> to vector<1x128xf32>
    %c2_110 = arith.constant 2 : index
    %c1_111 = arith.constant 1 : index
    %253 = memref.load %arg3[%c2_110, %c1_111] : memref<8x4xf32, #tpu.memory_space<smem>>
    %254 = vector.broadcast %253 : f32 to vector<1x128xf32>
    %255 = arith.mulf %252, %254 : vector<1x128xf32>
    %256 = vector.extract_strided_slice %197 {offsets = [2, 0], sizes = [1, 128], strides = [1, 1]} : vector<4x128xf32> to vector<1x128xf32>
    %c2_112 = arith.constant 2 : index
    %c2_113 = arith.constant 2 : index
    %257 = memref.load %arg3[%c2_112, %c2_113] : memref<8x4xf32, #tpu.memory_space<smem>>
    %258 = vector.broadcast %257 : f32 to vector<1x128xf32>
    %259 = arith.mulf %256, %258 : vector<1x128xf32>
    %260 = arith.addf %251, %259 : vector<1x128xf32>
    %261 = vector.extract_strided_slice %197 {offsets = [3, 0], sizes = [1, 128], strides = [1, 1]} : vector<4x128xf32> to vector<1x128xf32>
    %c2_114 = arith.constant 2 : index
    %c3_115 = arith.constant 3 : index
    %262 = memref.load %arg3[%c2_114, %c3_115] : memref<8x4xf32, #tpu.memory_space<smem>>
    %263 = vector.broadcast %262 : f32 to vector<1x128xf32>
    %264 = arith.mulf %261, %263 : vector<1x128xf32>
    %265 = arith.addf %255, %264 : vector<1x128xf32>
    %266 = arith.addf %260, %265 : vector<1x128xf32>
    %c1_116 = arith.constant 1 : index
    %c2_117 = arith.constant 2 : index
    %c0_118 = arith.constant 0 : index
    %267 = vector.load %arg5[%c1_116, %c2_117, %c0_118] : memref<2x8x128xf32, #tpu.memory_space<vmem>>, vector<1x1x128xf32>
    %268 = vector.shape_cast %267 : vector<1x1x128xf32> to vector<1x128xf32>
    %269 = vector.shape_cast %266 : vector<1x128xf32> to vector<1x1x128xf32>
    tpu.vector_store %arg5[%c1_116, %c2_117, %c0_118], %269 {strides = array<i32>} : memref<2x8x128xf32, #tpu.memory_space<vmem>>, vector<1x1x128xf32>,
    %270 = vector.extract_strided_slice %197 {offsets = [0, 0], sizes = [1, 128], strides = [1, 1]} : vector<4x128xf32> to vector<1x128xf32>
    %c3_119 = arith.constant 3 : index
    %c0_120 = arith.constant 0 : index
    %271 = memref.load %arg3[%c3_119, %c0_120] : memref<8x4xf32, #tpu.memory_space<smem>>
    %272 = vector.broadcast %271 : f32 to vector<1x128xf32>
    %273 = arith.mulf %270, %272 : vector<1x128xf32>
    %274 = vector.extract_strided_slice %3 {offsets = [3, 0], sizes = [1, 128], strides = [1, 1]} : vector<8x128xf32> to vector<1x128xf32>
    %275 = arith.addf %273, %274 : vector<1x128xf32>
    %276 = vector.extract_strided_slice %197 {offsets = [1, 0], sizes = [1, 128], strides = [1, 1]} : vector<4x128xf32> to vector<1x128xf32>
    %c3_121 = arith.constant 3 : index
    %c1_122 = arith.constant 1 : index
    %277 = memref.load %arg3[%c3_121, %c1_122] : memref<8x4xf32, #tpu.memory_space<smem>>
    %278 = vector.broadcast %277 : f32 to vector<1x128xf32>
    %279 = arith.mulf %276, %278 : vector<1x128xf32>
    %280 = vector.extract_strided_slice %197 {offsets = [2, 0], sizes = [1, 128], strides = [1, 1]} : vector<4x128xf32> to vector<1x128xf32>
    %c3_123 = arith.constant 3 : index
    %c2_124 = arith.constant 2 : index
    %281 = memref.load %arg3[%c3_123, %c2_124] : memref<8x4xf32, #tpu.memory_space<smem>>
    %282 = vector.broadcast %281 : f32 to vector<1x128xf32>
    %283 = arith.mulf %280, %282 : vector<1x128xf32>
    %284 = arith.addf %275, %283 : vector<1x128xf32>
    %285 = vector.extract_strided_slice %197 {offsets = [3, 0], sizes = [1, 128], strides = [1, 1]} : vector<4x128xf32> to vector<1x128xf32>
    %c3_125 = arith.constant 3 : index
    %c3_126 = arith.constant 3 : index
    %286 = memref.load %arg3[%c3_125, %c3_126] : memref<8x4xf32, #tpu.memory_space<smem>>
    %287 = vector.broadcast %286 : f32 to vector<1x128xf32>
    %288 = arith.mulf %285, %287 : vector<1x128xf32>
    %289 = arith.addf %279, %288 : vector<1x128xf32>
    %290 = arith.addf %284, %289 : vector<1x128xf32>
    %c1_127 = arith.constant 1 : index
    %c3_128 = arith.constant 3 : index
    %c0_129 = arith.constant 0 : index
    %291 = vector.load %arg5[%c1_127, %c3_128, %c0_129] : memref<2x8x128xf32, #tpu.memory_space<vmem>>, vector<1x1x128xf32>
    %292 = vector.shape_cast %291 : vector<1x1x128xf32> to vector<1x128xf32>
    %293 = vector.shape_cast %290 : vector<1x128xf32> to vector<1x1x128xf32>
    tpu.vector_store %arg5[%c1_127, %c3_128, %c0_129], %293 {strides = array<i32>} : memref<2x8x128xf32, #tpu.memory_space<vmem>>, vector<1x1x128xf32>,
    %294 = vector.extract_strided_slice %197 {offsets = [0, 0], sizes = [1, 128], strides = [1, 1]} : vector<4x128xf32> to vector<1x128xf32>
    %c4_130 = arith.constant 4 : index
    %c0_131 = arith.constant 0 : index
    %295 = memref.load %arg3[%c4_130, %c0_131] : memref<8x4xf32, #tpu.memory_space<smem>>
    %296 = vector.broadcast %295 : f32 to vector<1x128xf32>
    %297 = arith.mulf %294, %296 : vector<1x128xf32>
    %298 = vector.extract_strided_slice %3 {offsets = [4, 0], sizes = [1, 128], strides = [1, 1]} : vector<8x128xf32> to vector<1x128xf32>
    %299 = arith.addf %297, %298 : vector<1x128xf32>
    %300 = vector.extract_strided_slice %197 {offsets = [1, 0], sizes = [1, 128], strides = [1, 1]} : vector<4x128xf32> to vector<1x128xf32>
    %c4_132 = arith.constant 4 : index
    %c1_133 = arith.constant 1 : index
    %301 = memref.load %arg3[%c4_132, %c1_133] : memref<8x4xf32, #tpu.memory_space<smem>>
    %302 = vector.broadcast %301 : f32 to vector<1x128xf32>
    %303 = arith.mulf %300, %302 : vector<1x128xf32>
    %304 = vector.extract_strided_slice %197 {offsets = [2, 0], sizes = [1, 128], strides = [1, 1]} : vector<4x128xf32> to vector<1x128xf32>
    %c4_134 = arith.constant 4 : index
    %c2_135 = arith.constant 2 : index
    %305 = memref.load %arg3[%c4_134, %c2_135] : memref<8x4xf32, #tpu.memory_space<smem>>
    %306 = vector.broadcast %305 : f32 to vector<1x128xf32>
    %307 = arith.mulf %304, %306 : vector<1x128xf32>
    %308 = arith.addf %299, %307 : vector<1x128xf32>
    %309 = vector.extract_strided_slice %197 {offsets = [3, 0], sizes = [1, 128], strides = [1, 1]} : vector<4x128xf32> to vector<1x128xf32>
    %c4_136 = arith.constant 4 : index
    %c3_137 = arith.constant 3 : index
    %310 = memref.load %arg3[%c4_136, %c3_137] : memref<8x4xf32, #tpu.memory_space<smem>>
    %311 = vector.broadcast %310 : f32 to vector<1x128xf32>
    %312 = arith.mulf %309, %311 : vector<1x128xf32>
    %313 = arith.addf %303, %312 : vector<1x128xf32>
    %314 = arith.addf %308, %313 : vector<1x128xf32>
    %c1_138 = arith.constant 1 : index
    %c4_139 = arith.constant 4 : index
    %c0_140 = arith.constant 0 : index
    %315 = vector.load %arg5[%c1_138, %c4_139, %c0_140] : memref<2x8x128xf32, #tpu.memory_space<vmem>>, vector<1x1x128xf32>
    %316 = vector.shape_cast %315 : vector<1x1x128xf32> to vector<1x128xf32>
    %317 = vector.shape_cast %314 : vector<1x128xf32> to vector<1x1x128xf32>
    tpu.vector_store %arg5[%c1_138, %c4_139, %c0_140], %317 {strides = array<i32>} : memref<2x8x128xf32, #tpu.memory_space<vmem>>, vector<1x1x128xf32>,
    %318 = vector.extract_strided_slice %197 {offsets = [0, 0], sizes = [1, 128], strides = [1, 1]} : vector<4x128xf32> to vector<1x128xf32>
    %c5_141 = arith.constant 5 : index
    %c0_142 = arith.constant 0 : index
    %319 = memref.load %arg3[%c5_141, %c0_142] : memref<8x4xf32, #tpu.memory_space<smem>>
    %320 = vector.broadcast %319 : f32 to vector<1x128xf32>
    %321 = arith.mulf %318, %320 : vector<1x128xf32>
    %322 = vector.extract_strided_slice %3 {offsets = [5, 0], sizes = [1, 128], strides = [1, 1]} : vector<8x128xf32> to vector<1x128xf32>
    %323 = arith.addf %321, %322 : vector<1x128xf32>
    %324 = vector.extract_strided_slice %197 {offsets = [1, 0], sizes = [1, 128], strides = [1, 1]} : vector<4x128xf32> to vector<1x128xf32>
    %c5_143 = arith.constant 5 : index
    %c1_144 = arith.constant 1 : index
    %325 = memref.load %arg3[%c5_143, %c1_144] : memref<8x4xf32, #tpu.memory_space<smem>>
    %326 = vector.broadcast %325 : f32 to vector<1x128xf32>
    %327 = arith.mulf %324, %326 : vector<1x128xf32>
    %328 = vector.extract_strided_slice %197 {offsets = [2, 0], sizes = [1, 128], strides = [1, 1]} : vector<4x128xf32> to vector<1x128xf32>
    %c5_145 = arith.constant 5 : index
    %c2_146 = arith.constant 2 : index
    %329 = memref.load %arg3[%c5_145, %c2_146] : memref<8x4xf32, #tpu.memory_space<smem>>
    %330 = vector.broadcast %329 : f32 to vector<1x128xf32>
    %331 = arith.mulf %328, %330 : vector<1x128xf32>
    %332 = arith.addf %323, %331 : vector<1x128xf32>
    %333 = vector.extract_strided_slice %197 {offsets = [3, 0], sizes = [1, 128], strides = [1, 1]} : vector<4x128xf32> to vector<1x128xf32>
    %c5_147 = arith.constant 5 : index
    %c3_148 = arith.constant 3 : index
    %334 = memref.load %arg3[%c5_147, %c3_148] : memref<8x4xf32, #tpu.memory_space<smem>>
    %335 = vector.broadcast %334 : f32 to vector<1x128xf32>
    %336 = arith.mulf %333, %335 : vector<1x128xf32>
    %337 = arith.addf %327, %336 : vector<1x128xf32>
    %338 = arith.addf %332, %337 : vector<1x128xf32>
    %c1_149 = arith.constant 1 : index
    %c5_150 = arith.constant 5 : index
    %c0_151 = arith.constant 0 : index
    %339 = vector.load %arg5[%c1_149, %c5_150, %c0_151] : memref<2x8x128xf32, #tpu.memory_space<vmem>>, vector<1x1x128xf32>
    %340 = vector.shape_cast %339 : vector<1x1x128xf32> to vector<1x128xf32>
    %341 = vector.shape_cast %338 : vector<1x128xf32> to vector<1x1x128xf32>
    tpu.vector_store %arg5[%c1_149, %c5_150, %c0_151], %341 {strides = array<i32>} : memref<2x8x128xf32, #tpu.memory_space<vmem>>, vector<1x1x128xf32>,
    %342 = vector.extract_strided_slice %197 {offsets = [0, 0], sizes = [1, 128], strides = [1, 1]} : vector<4x128xf32> to vector<1x128xf32>
    %c6_152 = arith.constant 6 : index
    %c0_153 = arith.constant 0 : index
    %343 = memref.load %arg3[%c6_152, %c0_153] : memref<8x4xf32, #tpu.memory_space<smem>>
    %344 = vector.broadcast %343 : f32 to vector<1x128xf32>
    %345 = arith.mulf %342, %344 : vector<1x128xf32>
    %346 = vector.extract_strided_slice %3 {offsets = [6, 0], sizes = [1, 128], strides = [1, 1]} : vector<8x128xf32> to vector<1x128xf32>
    %347 = arith.addf %345, %346 : vector<1x128xf32>
    %348 = vector.extract_strided_slice %197 {offsets = [1, 0], sizes = [1, 128], strides = [1, 1]} : vector<4x128xf32> to vector<1x128xf32>
    %c6_154 = arith.constant 6 : index
    %c1_155 = arith.constant 1 : index
    %349 = memref.load %arg3[%c6_154, %c1_155] : memref<8x4xf32, #tpu.memory_space<smem>>
    %350 = vector.broadcast %349 : f32 to vector<1x128xf32>
    %351 = arith.mulf %348, %350 : vector<1x128xf32>
    %352 = vector.extract_strided_slice %197 {offsets = [2, 0], sizes = [1, 128], strides = [1, 1]} : vector<4x128xf32> to vector<1x128xf32>
    %c6_156 = arith.constant 6 : index
    %c2_157 = arith.constant 2 : index
    %353 = memref.load %arg3[%c6_156, %c2_157] : memref<8x4xf32, #tpu.memory_space<smem>>
    %354 = vector.broadcast %353 : f32 to vector<1x128xf32>
    %355 = arith.mulf %352, %354 : vector<1x128xf32>
    %356 = arith.addf %347, %355 : vector<1x128xf32>
    %357 = vector.extract_strided_slice %197 {offsets = [3, 0], sizes = [1, 128], strides = [1, 1]} : vector<4x128xf32> to vector<1x128xf32>
    %c6_158 = arith.constant 6 : index
    %c3_159 = arith.constant 3 : index
    %358 = memref.load %arg3[%c6_158, %c3_159] : memref<8x4xf32, #tpu.memory_space<smem>>
    %359 = vector.broadcast %358 : f32 to vector<1x128xf32>
    %360 = arith.mulf %357, %359 : vector<1x128xf32>
    %361 = arith.addf %351, %360 : vector<1x128xf32>
    %362 = arith.addf %356, %361 : vector<1x128xf32>
    %c1_160 = arith.constant 1 : index
    %c6_161 = arith.constant 6 : index
    %c0_162 = arith.constant 0 : index
    %363 = vector.load %arg5[%c1_160, %c6_161, %c0_162] : memref<2x8x128xf32, #tpu.memory_space<vmem>>, vector<1x1x128xf32>
    %364 = vector.shape_cast %363 : vector<1x1x128xf32> to vector<1x128xf32>
    %365 = vector.shape_cast %362 : vector<1x128xf32> to vector<1x1x128xf32>
    tpu.vector_store %arg5[%c1_160, %c6_161, %c0_162], %365 {strides = array<i32>} : memref<2x8x128xf32, #tpu.memory_space<vmem>>, vector<1x1x128xf32>,
    %366 = vector.extract_strided_slice %197 {offsets = [0, 0], sizes = [1, 128], strides = [1, 1]} : vector<4x128xf32> to vector<1x128xf32>
    %c7_163 = arith.constant 7 : index
    %c0_164 = arith.constant 0 : index
    %367 = memref.load %arg3[%c7_163, %c0_164] : memref<8x4xf32, #tpu.memory_space<smem>>
    %368 = vector.broadcast %367 : f32 to vector<1x128xf32>
    %369 = arith.mulf %366, %368 : vector<1x128xf32>
    %370 = vector.extract_strided_slice %3 {offsets = [7, 0], sizes = [1, 128], strides = [1, 1]} : vector<8x128xf32> to vector<1x128xf32>
    %371 = arith.addf %369, %370 : vector<1x128xf32>
    %372 = vector.extract_strided_slice %197 {offsets = [1, 0], sizes = [1, 128], strides = [1, 1]} : vector<4x128xf32> to vector<1x128xf32>
    %c7_165 = arith.constant 7 : index
    %c1_166 = arith.constant 1 : index
    %373 = memref.load %arg3[%c7_165, %c1_166] : memref<8x4xf32, #tpu.memory_space<smem>>
    %374 = vector.broadcast %373 : f32 to vector<1x128xf32>
    %375 = arith.mulf %372, %374 : vector<1x128xf32>
    %376 = vector.extract_strided_slice %197 {offsets = [2, 0], sizes = [1, 128], strides = [1, 1]} : vector<4x128xf32> to vector<1x128xf32>
    %c7_167 = arith.constant 7 : index
    %c2_168 = arith.constant 2 : index
    %377 = memref.load %arg3[%c7_167, %c2_168] : memref<8x4xf32, #tpu.memory_space<smem>>
    %378 = vector.broadcast %377 : f32 to vector<1x128xf32>
    %379 = arith.mulf %376, %378 : vector<1x128xf32>
    %380 = arith.addf %371, %379 : vector<1x128xf32>
    %381 = vector.extract_strided_slice %197 {offsets = [3, 0], sizes = [1, 128], strides = [1, 1]} : vector<4x128xf32> to vector<1x128xf32>
    %c7_169 = arith.constant 7 : index
    %c3_170 = arith.constant 3 : index
    %382 = memref.load %arg3[%c7_169, %c3_170] : memref<8x4xf32, #tpu.memory_space<smem>>
    %383 = vector.broadcast %382 : f32 to vector<1x128xf32>
    %384 = arith.mulf %381, %383 : vector<1x128xf32>
    %385 = arith.addf %375, %384 : vector<1x128xf32>
    %386 = arith.addf %380, %385 : vector<1x128xf32>
    %c1_171 = arith.constant 1 : index
    %c7_172 = arith.constant 7 : index
    %c0_173 = arith.constant 0 : index
    %387 = vector.load %arg5[%c1_171, %c7_172, %c0_173] : memref<2x8x128xf32, #tpu.memory_space<vmem>>, vector<1x1x128xf32>
    %388 = vector.shape_cast %387 : vector<1x1x128xf32> to vector<1x128xf32>
    %389 = vector.shape_cast %386 : vector<1x128xf32> to vector<1x1x128xf32>
    tpu.vector_store %arg5[%c1_171, %c7_172, %c0_173], %389 {strides = array<i32>} : memref<2x8x128xf32, #tpu.memory_space<vmem>>, vector<1x1x128xf32>,
    return
  }
  func.func @transform_0(%arg0: i32) -> (i32, i32) {
    %c0_i32 = arith.constant 0 : i32
    %c0_i32_0 = arith.constant 0 : i32
    return %arg0, %c0_i32 : i32, i32
  }
  func.func @transform_1(%arg0: i32) -> (i32, i32) {
    %c0_i32 = arith.constant 0 : i32
    %c0_i32_0 = arith.constant 0 : i32
    %c0_i32_1 = arith.constant 0 : i32
    return %c0_i32, %c0_i32_0 : i32, i32
  }
  func.func @transform_2(%arg0: i32) -> (i32, i32) {
    %c0_i32 = arith.constant 0 : i32
    %c0_i32_0 = arith.constant 0 : i32
    %c0_i32_1 = arith.constant 0 : i32
    return %c0_i32, %c0_i32_0 : i32, i32
  }
  func.func @transform_3(%arg0: i32) -> (i32, i32) {
    %c0_i32 = arith.constant 0 : i32
    %c0_i32_0 = arith.constant 0 : i32
    %c0_i32_1 = arith.constant 0 : i32
    return %c0_i32, %c0_i32_0 : i32, i32
  }
  func.func @transform_4(%arg0: i32) -> (i32, i32, i32) {
    %c0_i32 = arith.constant 0 : i32
    %c0_i32_0 = arith.constant 0 : i32
    %c0_i32_1 = arith.constant 0 : i32
    return %arg0, %c0_i32, %c0_i32_0 : i32, i32, i32
  }
}

</mosaic_0001>

<llo_original>
// kernel: graph_conv.1
$region0: #{graph_conv.1}
  #allocation0 [shape = 'u32[]', space=smem, size = 0x4, offset = 0x4, fixed_abs, tag = 'smem constant byte address 0x4 - core index']
  #allocation1 [shape = 'u32[72,128]{1,0:T(1,128)}', space=vmem, size = 0x9000, scoped, tag = 'internal scratch']
  %s0 = inlined_call_operand.vmem [shape: bf16[8,128], index: 0, kind: input, shape index: {}]
  %s1 = inlined_call_operand.vmem [shape: bf16[128,128], index: 1, kind: input, shape index: {}]
  %s2 = inlined_call_operand.vmem [shape: f32[8,4], index: 2, kind: input, shape index: {}]
  %s3 = inlined_call_operand.vmem [shape: f32[8,128], index: 3, kind: input, shape index: {}]
  %s4 = inlined_call_operand.vmem [shape: f32[2,8,128], index: 4, kind: output, shape index: {}]
  %s5 = sld [smem:[#allocation0]]
  $region30: #{graph_conv.1} parent=0
    _
  %s7 = ssub.s32 1, %s5
  %s8 = scalar_select 0, %s7, %s5
  $region1: #{graph_conv.1} parent=0
    #allocation2 [shape = 'u8[4096]{0}', space=smem, size = 0x1000, scoped, tag = 'input window, operand 2, single buffered']
    #allocation3 [shape = 's32[1]{0}', space=sflag, size = 0x4, scoped, tag = 'scoped memory for graph_conv.1']
    %9 = vsyncpa [#allocation3], 0
    // Predicated region
    $region2: #{graph_conv.1} parent=1 // pred_check
      _
    $region3: #{graph_conv.1} parent=1 // pred_check_branch
      %11 = sbr.rel (0) target = $region5
    $region4: #{graph_conv.1} parent=1 // pred_region
      _
    $region5: #{graph_conv.1} parent=1 // pred_fallthru
      _
    // Predicated region
    $region6: #{graph_conv.1} parent=1 // pred_check
      _
    $region7: #{graph_conv.1} parent=1 // pred_check_branch
      %13 = sbr.rel (0) target = $region9
    $region8: #{graph_conv.1} parent=1 // pred_region
      _
    $region9: #{graph_conv.1} parent=1 // pred_fallthru
      _
    // Predicated region
    $region10: #{graph_conv.1} parent=1 // pred_check
      _
    $region11: #{graph_conv.1} parent=1 // pred_check_branch
      %15 = sbr.rel (0) target = $region13
    $region12: #{graph_conv.1} parent=1 // pred_region
      %17 = vsyncadd [#allocation3], 0
      %s19 = sshll.u32 %s2, 4
      %s20 = int_to_ptr.vmem [resolvable:$true] %s19
      %22 = dma.vmem_to_smem %s20, 128, [#allocation2], [#allocation3]
    $region13: #{graph_conv.1} parent=1 // pred_fallthru
      _
    // Predicated region
    $region14: #{graph_conv.1} parent=1 // pred_check
      _
    $region15: #{graph_conv.1} parent=1 // pred_check_branch
      %24 = sbr.rel (0) target = $region17
    $region16: #{graph_conv.1} parent=1 // pred_region
      _
    $region17: #{graph_conv.1} parent=1 // pred_fallthru
      _
    // Predicated region
    $region18: #{graph_conv.1} parent=1 // pred_check
      _
    $region19: #{graph_conv.1} parent=1 // pred_check_branch
      %26 = sbr.rel (0) target = $region21
    $region20: #{graph_conv.1} parent=1 // pred_region
      %28 = dma.done [#allocation3], 128
    $region21: #{graph_conv.1} parent=1 // pred_fallthru
      _
    %29 = sfence
    %v30 = vld [vmem:[%s0] sm:$0xf]
    %v31 = vld [vmem:[%s1] sm:$0xf]
    %v32 = vld [vmem:[%s1 + $0x4] sm:$0xf]
    %v33 = vld [vmem:[%s1 + $0x8] sm:$0xf]
    %v34 = vld [vmem:[%s1 + $0xc] sm:$0xf]
    %v35 = vld [vmem:[%s1 + $0x10] sm:$0xf]
    %v36 = vld [vmem:[%s1 + $0x14] sm:$0xf]
    %v37 = vld [vmem:[%s1 + $0x18] sm:$0xf]
    %v38 = vld [vmem:[%s1 + $0x1c] sm:$0xf]
    %v39 = vld [vmem:[%s1 + $0x20] sm:$0xf]
    %v40 = vld [vmem:[%s1 + $0x24] sm:$0xf]
    %v41 = vld [vmem:[%s1 + $0x28] sm:$0xf]
    %v42 = vld [vmem:[%s1 + $0x2c] sm:$0xf]
    %v43 = vld [vmem:[%s1 + $0x30] sm:$0xf]
    %v44 = vld [vmem:[%s1 + $0x34] sm:$0xf]
    %v45 = vld [vmem:[%s1 + $0x38] sm:$0xf]
    %v46 = vld [vmem:[%s1 + $0x3c] sm:$0xf]
    %v63 = vunpack.c.l.b16 %v31
    %v64 = vunpack.c.l.b16 %v32
    %v65 = vunpack.c.l.b16 %v33
    %v66 = vunpack.c.l.b16 %v34
    %v67 = vunpack.c.l.b16 %v35
    %v68 = vunpack.c.l.b16 %v36
    %v69 = vunpack.c.l.b16 %v37
    %v70 = vunpack.c.l.b16 %v38
    %v71 = vunpack.c.l.b16 %v39
    %v72 = vunpack.c.l.b16 %v40
    %v73 = vunpack.c.l.b16 %v41
    %v74 = vunpack.c.l.b16 %v42
    %v75 = vunpack.c.l.b16 %v43
    %v76 = vunpack.c.l.b16 %v44
    %v77 = vunpack.c.l.b16 %v45
    %v78 = vunpack.c.l.b16 %v46
    %v79 = vpack.c.b16 %v64, %v63
    %v80 = vpack.c.b16 %v66, %v65
    %v81 = vpack.c.b16 %v68, %v67
    %v82 = vpack.c.b16 %v70, %v69
    %v83 = vpack.c.b16 %v72, %v71
    %v84 = vpack.c.b16 %v74, %v73
    %v85 = vpack.c.b16 %v76, %v75
    %v86 = vpack.c.b16 %v78, %v77
    %95 = vmatpush.bf16.msra.mxu0 %v86
    %96 = vmatpush.bf16.msra.mxu0 %v85
    %97 = vmatpush.bf16.msra.mxu0 %v84
    %98 = vmatpush.bf16.msra.mxu0 %v83
    %99 = vmatpush.bf16.msra.mxu0 %v82
    %100 = vmatpush.bf16.msra.mxu0 %v81
    %101 = vmatpush.bf16.msra.mxu0 %v80
    %102 = vmatpush.bf16.msra.mxu0 %v79
    %103 = vmatmul.bf16.gmra.mxu0 %v30
    %v104 = vpop.f32.mrf.mxu0
    %v105 = vadd.f32 0.0, %v104
    %v106 = vpop.f32.mrf.mxu0
    %107 = vdwg.mxu0
    %v108 = vld [vmem:[%s3] sm:$0xff]
    %s109 = sld [smem:[#allocation2]]
    %v110 = vstv %s109
    %v111 = vmul.f32 %v105, %v110
    %v112 = vadd.f32 %v111, %v108
    %s113 = sld [smem:[#allocation2 + $0x1]]
    %v114 = vstv %s113
    %v115 = vmul.f32 %v105, %v114
    %s116 = sld [smem:[#allocation2 + $0x2]]
    %v117 = vstv %s116
    %v118 = vmul.f32 %v105, %v117
    %v120 = vrot.slane %v118, 2
    %v122 = vadd.f32 %v112, %v120
    %s123 = sld [smem:[#allocation2 + $0x3]]
    %v124 = vstv %s123
    %v125 = vmul.f32 %v105, %v124
    %v127 = vrot.slane %v125, 2
    %v129 = vadd.f32 %v115, %v127
    %v131 = vrot.slane %v129, 1
    %v133 = vadd.f32 %v122, %v131
    %134 = vst [vmem:[%s4] sm:$0x1] %v133
    %s135 = sld [smem:[#allocation2 + $0x80]]
    %v136 = vstv %s135
    %v137 = vmul.f32 %v105, %v136
    %v139 = vrot.slane %v108, 1
    %v141 = vadd.f32 %v137, %v139
    %s142 = sld [smem:[#allocation2 + $0x81]]
    %v143 = vstv %s142
    %v144 = vmul.f32 %v105, %v143
    %s145 = sld [smem:[#allocation2 + $0x82]]
    %v146 = vstv %s145
    %v147 = vmul.f32 %v105, %v146
    %v149 = vrot.slane %v147, 2
    %v151 = vadd.f32 %v141, %v149
    %s152 = sld [smem:[#allocation2 + $0x83]]
    %v153 = vstv %s152
    %v154 = vmul.f32 %v105, %v153
    %v156 = vrot.slane %v154, 2
    %v158 = vadd.f32 %v144, %v156
    %v160 = vrot.slane %v158, 1
    %v162 = vadd.f32 %v151, %v160
    %163 = vst [vmem:[%s4 + $0x1] sm:$0x1] %v162
    %s164 = sld [smem:[#allocation2 + $0x100]]
    %v165 = vstv %s164
    %v166 = vmul.f32 %v105, %v165
    %v167 = vrot.slane %v108, 2
    %v169 = vadd.f32 %v166, %v167
    %s170 = sld [smem:[#allocation2 + $0x101]]
    %v171 = vstv %s170
    %v172 = vmul.f32 %v105, %v171
    %s173 = sld [smem:[#allocation2 + $0x102]]
    %v174 = vstv %s173
    %v175 = vmul.f32 %v105, %v174
    %v177 = vrot.slane %v175, 2
    %v179 = vadd.f32 %v169, %v177
    %s180 = sld [smem:[#allocation2 + $0x103]]
    %v181 = vstv %s180
    %v182 = vmul.f32 %v105, %v181
    %v184 = vrot.slane %v182, 2
    %v186 = vadd.f32 %v172, %v184
    %v188 = vrot.slane %v186, 1
    %v190 = vadd.f32 %v179, %v188
    %191 = vst [vmem:[%s4 + $0x2] sm:$0x1] %v190
    %s192 = sld [smem:[#allocation2 + $0x180]]
    %v193 = vstv %s192
    %v194 = vmul.f32 %v105, %v193
    %v195 = vrot.slane %v108, 3
    %v197 = vadd.f32 %v194, %v195
    %s198 = sld [smem:[#allocation2 + $0x181]]
    %v199 = vstv %s198
    %v200 = vmul.f32 %v105, %v199
    %s201 = sld [smem:[#allocation2 + $0x182]]
    %v202 = vstv %s201
    %v203 = vmul.f32 %v105, %v202
    %v205 = vrot.slane %v203, 2
    %v207 = vadd.f32 %v197, %v205
    %s208 = sld [smem:[#allocation2 + $0x183]]
    %v209 = vstv %s208
    %v210 = vmul.f32 %v105, %v209
    %v212 = vrot.slane %v210, 2
    %v214 = vadd.f32 %v200, %v212
    %v216 = vrot.slane %v214, 1
    %v218 = vadd.f32 %v207, %v216
    %219 = vst [vmem:[%s4 + $0x3] sm:$0x1] %v218
    %s220 = sld [smem:[#allocation2 + $0x200]]
    %v221 = vstv %s220
    %v222 = vmul.f32 %v105, %v221
    %v223 = vrot.slane %v108, 4
    %v225 = vadd.f32 %v222, %v223
    %s226 = sld [smem:[#allocation2 + $0x201]]
    %v227 = vstv %s226
    %v228 = vmul.f32 %v105, %v227
    %s229 = sld [smem:[#allocation2 + $0x202]]
    %v230 = vstv %s229
    %v231 = vmul.f32 %v105, %v230
    %v233 = vrot.slane %v231, 2
    %v235 = vadd.f32 %v225, %v233
    %s236 = sld [smem:[#allocation2 + $0x203]]
    %v237 = vstv %s236
    %v238 = vmul.f32 %v105, %v237
    %v240 = vrot.slane %v238, 2
    %v242 = vadd.f32 %v228, %v240
    %v244 = vrot.slane %v242, 1
    %v246 = vadd.f32 %v235, %v244
    %247 = vst [vmem:[%s4 + $0x4] sm:$0x1] %v246
    %s248 = sld [smem:[#allocation2 + $0x280]]
    %v249 = vstv %s248
    %v250 = vmul.f32 %v105, %v249
    %v251 = vrot.slane %v108, 5
    %v253 = vadd.f32 %v250, %v251
    %s254 = sld [smem:[#allocation2 + $0x281]]
    %v255 = vstv %s254
    %v256 = vmul.f32 %v105, %v255
    %s257 = sld [smem:[#allocation2 + $0x282]]
    %v258 = vstv %s257
    %v259 = vmul.f32 %v105, %v258
    %v261 = vrot.slane %v259, 2
    %v263 = vadd.f32 %v253, %v261
    %s264 = sld [smem:[#allocation2 + $0x283]]
    %v265 = vstv %s264
    %v266 = vmul.f32 %v105, %v265
    %v268 = vrot.slane %v266, 2
    %v270 = vadd.f32 %v256, %v268
    %v272 = vrot.slane %v270, 1
    %v274 = vadd.f32 %v263, %v272
    %275 = vst [vmem:[%s4 + $0x5] sm:$0x1] %v274
    %s276 = sld [smem:[#allocation2 + $0x300]]
    %v277 = vstv %s276
    %v278 = vmul.f32 %v105, %v277
    %v279 = vrot.slane %v108, 6
    %v281 = vadd.f32 %v278, %v279
    %s282 = sld [smem:[#allocation2 + $0x301]]
    %v283 = vstv %s282
    %v284 = vmul.f32 %v105, %v283
    %s285 = sld [smem:[#allocation2 + $0x302]]
    %v286 = vstv %s285
    %v287 = vmul.f32 %v105, %v286
    %v289 = vrot.slane %v287, 2
    %v291 = vadd.f32 %v281, %v289
    %s292 = sld [smem:[#allocation2 + $0x303]]
    %v293 = vstv %s292
    %v294 = vmul.f32 %v105, %v293
    %v296 = vrot.slane %v294, 2
    %v298 = vadd.f32 %v284, %v296
    %v300 = vrot.slane %v298, 1
    %v302 = vadd.f32 %v291, %v300
    %303 = vst [vmem:[%s4 + $0x6] sm:$0x1] %v302
    %s304 = sld [smem:[#allocation2 + $0x380]]
    %v305 = vstv %s304
    %v306 = vmul.f32 %v105, %v305
    %v307 = vrot.slane %v108, 7
    %v309 = vadd.f32 %v306, %v307
    %s310 = sld [smem:[#allocation2 + $0x381]]
    %v311 = vstv %s310
    %v312 = vmul.f32 %v105, %v311
    %s313 = sld [smem:[#allocation2 + $0x382]]
    %v314 = vstv %s313
    %v315 = vmul.f32 %v105, %v314
    %v317 = vrot.slane %v315, 2
    %v319 = vadd.f32 %v309, %v317
    %s320 = sld [smem:[#allocation2 + $0x383]]
    %v321 = vstv %s320
    %v322 = vmul.f32 %v105, %v321
    %v324 = vrot.slane %v322, 2
    %v326 = vadd.f32 %v312, %v324
    %v328 = vrot.slane %v326, 1
    %v330 = vadd.f32 %v319, %v328
    %331 = vst [vmem:[%s4 + $0x7] sm:$0x1] %v330
    %s332 = sld [smem:[#allocation2]]
    %v333 = vstv %s332
    %v334 = vmul.f32 %v105, %v333
    %v335 = vadd.f32 %v334, %v223
    %s336 = sld [smem:[#allocation2 + $0x1]]
    %v337 = vstv %s336
    %v338 = vmul.f32 %v105, %v337
    %s339 = sld [smem:[#allocation2 + $0x2]]
    %v340 = vstv %s339
    %v341 = vmul.f32 %v105, %v340
    %v343 = vrot.slane %v341, 2
    %v345 = vadd.f32 %v335, %v343
    %s346 = sld [smem:[#allocation2 + $0x3]]
    %v347 = vstv %s346
    %v348 = vmul.f32 %v105, %v347
    %v350 = vrot.slane %v348, 2
    %v352 = vadd.f32 %v338, %v350
    %v354 = vrot.slane %v352, 1
    %v356 = vadd.f32 %v345, %v354
    %s357 = scalar_lea.vmem %s4, 8
    %358 = vst [vmem:[%s357 - $0x4] sm:$0x10] %v356
    %s359 = sld [smem:[#allocation2 + $0x80]]
    %v360 = vstv %s359
    %v361 = vmul.f32 %v105, %v360
    %v362 = vadd.f32 %v361, %v251
    %s363 = sld [smem:[#allocation2 + $0x81]]
    %v364 = vstv %s363
    %v365 = vmul.f32 %v105, %v364
    %s366 = sld [smem:[#allocation2 + $0x82]]
    %v367 = vstv %s366
    %v368 = vmul.f32 %v105, %v367
    %v370 = vrot.slane %v368, 2
    %v372 = vadd.f32 %v362, %v370
    %s373 = sld [smem:[#allocation2 + $0x83]]
    %v374 = vstv %s373
    %v375 = vmul.f32 %v105, %v374
    %v377 = vrot.slane %v375, 2
    %v379 = vadd.f32 %v365, %v377
    %v381 = vrot.slane %v379, 1
    %v383 = vadd.f32 %v372, %v381
    %384 = vst [vmem:[%s357 - $0x3] sm:$0x10] %v383
    %s385 = sld [smem:[#allocation2 + $0x100]]
    %v386 = vstv %s385
    %v387 = vmul.f32 %v105, %v386
    %v388 = vadd.f32 %v387, %v279
    %s389 = sld [smem:[#allocation2 + $0x101]]
    %v390 = vstv %s389
    %v391 = vmul.f32 %v105, %v390
    %s392 = sld [smem:[#allocation2 + $0x102]]
    %v393 = vstv %s392
    %v394 = vmul.f32 %v105, %v393
    %v396 = vrot.slane %v394, 2
    %v398 = vadd.f32 %v388, %v396
    %s399 = sld [smem:[#allocation2 + $0x103]]
    %v400 = vstv %s399
    %v401 = vmul.f32 %v105, %v400
    %v403 = vrot.slane %v401, 2
    %v405 = vadd.f32 %v391, %v403
    %v407 = vrot.slane %v405, 1
    %v409 = vadd.f32 %v398, %v407
    %410 = vst [vmem:[%s357 - $0x2] sm:$0x10] %v409
    %s411 = sld [smem:[#allocation2 + $0x180]]
    %v412 = vstv %s411
    %v413 = vmul.f32 %v105, %v412
    %v414 = vadd.f32 %v413, %v307
    %s415 = sld [smem:[#allocation2 + $0x181]]
    %v416 = vstv %s415
    %v417 = vmul.f32 %v105, %v416
    %s418 = sld [smem:[#allocation2 + $0x182]]
    %v419 = vstv %s418
    %v420 = vmul.f32 %v105, %v419
    %v422 = vrot.slane %v420, 2
    %v424 = vadd.f32 %v414, %v422
    %s425 = sld [smem:[#allocation2 + $0x183]]
    %v426 = vstv %s425
    %v427 = vmul.f32 %v105, %v426
    %v429 = vrot.slane %v427, 2
    %v431 = vadd.f32 %v417, %v429
    %v433 = vrot.slane %v431, 1
    %v435 = vadd.f32 %v424, %v433
    %436 = vst [vmem:[%s357 - $0x1] sm:$0x10] %v435
    %s437 = sld [smem:[#allocation2 + $0x200]]
    %v438 = vstv %s437
    %v439 = vmul.f32 %v105, %v438
    %v440 = vadd.f32 %v439, %v108
    %s441 = sld [smem:[#allocation2 + $0x201]]
    %v442 = vstv %s441
    %v443 = vmul.f32 %v105, %v442
    %s444 = sld [smem:[#allocation2 + $0x202]]
    %v445 = vstv %s444
    %v446 = vmul.f32 %v105, %v445
    %v448 = vrot.slane %v446, 2
    %v450 = vadd.f32 %v440, %v448
    %s451 = sld [smem:[#allocation2 + $0x203]]
    %v452 = vstv %s451
    %v453 = vmul.f32 %v105, %v452
    %v455 = vrot.slane %v453, 2
    %v457 = vadd.f32 %v443, %v455
    %v459 = vrot.slane %v457, 1
    %v461 = vadd.f32 %v450, %v459
    %462 = vst [vmem:[%s357] sm:$0x10] %v461
    %s463 = sld [smem:[#allocation2 + $0x280]]
    %v464 = vstv %s463
    %v465 = vmul.f32 %v105, %v464
    %v466 = vadd.f32 %v465, %v139
    %s467 = sld [smem:[#allocation2 + $0x281]]
    %v468 = vstv %s467
    %v469 = vmul.f32 %v105, %v468
    %s470 = sld [smem:[#allocation2 + $0x282]]
    %v471 = vstv %s470
    %v472 = vmul.f32 %v105, %v471
    %v474 = vrot.slane %v472, 2
    %v476 = vadd.f32 %v466, %v474
    %s477 = sld [smem:[#allocation2 + $0x283]]
    %v478 = vstv %s477
    %v479 = vmul.f32 %v105, %v478
    %v481 = vrot.slane %v479, 2
    %v483 = vadd.f32 %v469, %v481
    %v485 = vrot.slane %v483, 1
    %v487 = vadd.f32 %v476, %v485
    %488 = vst [vmem:[%s357 + $0x1] sm:$0x10] %v487
    %s489 = sld [smem:[#allocation2 + $0x300]]
    %v490 = vstv %s489
    %v491 = vmul.f32 %v105, %v490
    %v492 = vadd.f32 %v491, %v167
    %s493 = sld [smem:[#allocation2 + $0x301]]
    %v494 = vstv %s493
    %v495 = vmul.f32 %v105, %v494
    %s496 = sld [smem:[#allocation2 + $0x302]]
    %v497 = vstv %s496
    %v498 = vmul.f32 %v105, %v497
    %v500 = vrot.slane %v498, 2
    %v502 = vadd.f32 %v492, %v500
    %s503 = sld [smem:[#allocation2 + $0x303]]
    %v504 = vstv %s503
    %v505 = vmul.f32 %v105, %v504
    %v507 = vrot.slane %v505, 2
    %v509 = vadd.f32 %v495, %v507
    %v511 = vrot.slane %v509, 1
    %v513 = vadd.f32 %v502, %v511
    %514 = vst [vmem:[%s357 + $0x2] sm:$0x10] %v513
    %s515 = sld [smem:[#allocation2 + $0x380]]
    %v516 = vstv %s515
    %v517 = vmul.f32 %v105, %v516
    %v518 = vadd.f32 %v517, %v195
    %s519 = sld [smem:[#allocation2 + $0x381]]
    %v520 = vstv %s519
    %v521 = vmul.f32 %v105, %v520
    %s522 = sld [smem:[#allocation2 + $0x382]]
    %v523 = vstv %s522
    %v524 = vmul.f32 %v105, %v523
    %v526 = vrot.slane %v524, 2
    %v528 = vadd.f32 %v518, %v526
    %s529 = sld [smem:[#allocation2 + $0x383]]
    %v530 = vstv %s529
    %v531 = vmul.f32 %v105, %v530
    %v533 = vrot.slane %v531, 2
    %v535 = vadd.f32 %v521, %v533
    %v537 = vrot.slane %v535, 1
    %v539 = vadd.f32 %v528, %v537
    %540 = vst [vmem:[%s357 + $0x3] sm:$0x10] %v539
    // Predicated region
    $region22: #{graph_conv.1} parent=1 // pred_check
      _
    $region23: #{graph_conv.1} parent=1 // pred_check_branch
      %542 = sbr.rel (0) target = $region25
    $region24: #{graph_conv.1} parent=1 // pred_region
      _
    $region25: #{graph_conv.1} parent=1 // pred_fallthru
      _
    // Predicated region
    $region26: #{graph_conv.1} parent=1 // pred_check
      _
    $region27: #{graph_conv.1} parent=1 // pred_check_branch
      %544 = sbr.rel (0) target = $region29
    $region28: #{graph_conv.1} parent=1 // pred_region
      _
    $region29: #{graph_conv.1} parent=1 // pred_fallthru
      _
    %545 = vsyncpa [#allocation3], 1

</llo_original>
